<compile_context>
chip_gen: v7x
topology: tpu7x:2x2x1
jax: 0.10.0
libtpu: 0.0.40
codegen_flags: <defaults>
</compile_context>

<pallas_src>
import functools

import jax
import jax.numpy as jnp
from jax.experimental import pallas as pl
from jax.experimental.pallas import tpu as pltpu


def _agcn_kernel(K,
                 x_ref, w1_ref, b1_ref, w2_ref, b2_ref,
                 lap_hbm, scores_ref, temp_ref, sbias_ref,
                 out_ref,
                 lap_vmem, lap_sem):
    """Whole-model forward, transposed (feature, node) layout, N on lanes.

    x_ref     : VMEM (nfeat, N)  bf16
    w1_ref    : VMEM (nhid, nfeat) bf16,  b1_ref VMEM (nhid, 1) f32
    w2_ref    : VMEM (nclass, nhid) bf16, b2_ref VMEM (nclass, 1) f32
    lap_hbm   : HBM  (N, N) bf16   -- L^T (DMA'd manually, overlapped with MLP)
    scores_ref: VMEM (nclass, K+1) f32 -- gate score columns
    temp_ref  : SMEM (K,)   f32 -- tanh(temp), read as scalars
    sbias_ref : SMEM (K+1,) f32 -- gate biases, read as scalars
    out_ref   : VMEM (nclass, N) f32
    lap_vmem  : VMEM (N, N) bf16 scratch, lap_sem: DMA semaphore
    """
    # Kick off the dominant N^2 transfer first; it overlaps the MLP below.
    lap_cp = pltpu.make_async_copy(lap_hbm, lap_vmem, lap_sem)
    lap_cp.start()

    # ---- MLP (transposed): bf16 MXU operands, f32 accumulation + elementwise ----
    h = jnp.dot(w1_ref[...], x_ref[...],
                preferred_element_type=jnp.float32) + b1_ref[...]      # (nhid, N)
    h = jnp.maximum(h, 0.0)
    z = jnp.dot(w2_ref[...], h.astype(jnp.bfloat16),
                preferred_element_type=jnp.float32) + b2_ref[...]      # (nclass, N)

    # ---- gate 0: sigmoid(score_0 . z + bias_0), sublane mul + reduce ----
    g0 = jnp.sum(z * scores_ref[:, 0:1], axis=0, keepdims=True)        # (1, N)
    s0 = jax.nn.sigmoid(g0 + sbias_ref[0])
    hidden = s0 * z
    inp = z

    # Block on the Laplacian only now, right before its first use.
    lap_cp.wait()
    lap_t = lap_vmem[...]                                              # (N, N) bf16 = L^T

    # ---- K propagation steps (K static & small -> unrolled Python loop;
    #      switch to lax.fori_loop(..., unroll=True) if K grows, to bound
    #      live ranges of inp/hidden/mid) ----
    for i in range(K):
        # mid_T = inp_T @ L^T == (L @ inp)^T ; f32 accumulation on the MXU.
        mid = jnp.dot(inp.astype(jnp.bfloat16), lap_t,
                      preferred_element_type=jnp.float32)              # (nclass, N)
        inp = inp - temp_ref[i] * mid
        gi = jnp.sum(inp * scores_ref[:, i + 1:i + 2], axis=0, keepdims=True)
        si = jax.nn.sigmoid(gi + sbias_ref[i + 1])
        hidden = hidden + si * inp

    # ---- log_softmax over classes (sublane axis in this layout) ----
    m = jnp.max(hidden, axis=0, keepdims=True)
    shifted = hidden - m
    lse = jnp.log(jnp.sum(jnp.exp(shifted), axis=0, keepdims=True))
    out_ref[...] = shifted - lse


def agcn_forward(x, w1, b1, w2, b2, lap, temp, scores, sbias, *, K):
    """Forward for one graph (eval mode: dropout = identity).

    x      : (N, nfeat) f32 node features
    w1, b1 : lin1 params in PyTorch Linear layout: w1 (nhid, nfeat), b1 (nhid,)
    w2, b2 : lin2 params: w2 (nclass, nhid), b2 (nclass,)
    lap    : (N, N) dense symmetric-normalized Laplacian  L = I - D^-1/2 A D^-1/2
    temp   : (K,)   raw GPR temperatures (tanh applied here, hoisted out of kernel)
    scores : (K+1, nclass) gate score vectors (row i == module's scores[i].T)
    sbias  : (K+1,) gate biases
    Returns (N, nclass) log-softmax scores.
    """
    N, nfeat = x.shape
    nhid = w1.shape[0]
    nclass = w2.shape[0]

    # --- transposed / bf16 plumbing (all done once in the wrapper) ---
    x_t = x.T.astype(jnp.bfloat16)                      # (nfeat, N)
    w1_b = w1.astype(jnp.bfloat16)                      # (nhid, nfeat)
    w2_b = w2.astype(jnp.bfloat16)                      # (nclass, nhid)
    b1_c = b1.reshape(nhid, 1).astype(jnp.float32)
    b2_c = b2.reshape(nclass, 1).astype(jnp.float32)
    lap_t = lap.T.astype(jnp.bfloat16)                  # pass L^T: exact even if L asymmetric
    scores_t = scores.T.astype(jnp.float32)             # (nclass, K+1)
    temp_t = jnp.tanh(temp.astype(jnp.float32))         # hoisted K-element transform
    sbias_f = sbias.astype(jnp.float32)

    # --- VMEM budget: explicit resident + intermediate footprint, generation-aware cap ---
    def _b(shape, itemsize):
        n = 1
        for s in shape:
            n *= s
        return n * itemsize

    resident = (_b((nfeat, N), 2) + _b((nhid, nfeat), 2) + _b((nhid, 1), 4)
                + _b((nclass, nhid), 2) + _b((nclass, 1), 4)
                + _b((N, N), 2)                     # Laplacian VMEM scratch
                + _b((nclass, K + 1), 4)
                + _b((nclass, N), 4))               # output
    intermediates = (_b((nhid, N), 4) + _b((nhid, N), 2)        # h (f32) + bf16 copy
                     + 4 * _b((nclass, N), 4)                   # z / inp / hidden / mid
                     + _b((nclass, N), 2))                      # bf16 copy of inp
    need = resident + intermediates + (2 << 20)                 # fixed 2 MiB margin
    try:
        vmem_cap = int(pltpu.get_tpu_info().vmem_capacity_bytes)
    except Exception:  # conservative fallback (v7x per-TC capacity)
        vmem_cap = 64 << 20
    vmem_limit = int(min(int(0.8 * vmem_cap), max(16 << 20, need)))

    vmem = pl.BlockSpec(memory_space=pltpu.MemorySpace.VMEM)
    smem = pl.BlockSpec(memory_space=pltpu.MemorySpace.SMEM)
    hbm = pl.BlockSpec(memory_space=pl.ANY)

    kernel = functools.partial(_agcn_kernel, K)
    # Small single graph: no grid; every operand is one full-array block, the
    # Laplacian alone stays in HBM and is DMA'd manually inside the kernel.
    out_t = pl.pallas_call(
        kernel,
        out_shape=jax.ShapeDtypeStruct((nclass, N), jnp.float32),
        in_specs=[vmem, vmem, vmem, vmem, vmem,   # x_t, w1, b1, w2, b2
                  hbm,                            # lap_t (manual overlapped DMA)
                  vmem,                           # scores_t
                  smem, smem],                    # tanh(temp), sbias (scalars)
        out_specs=vmem,
        scratch_shapes=[pltpu.VMEM((N, N), jnp.bfloat16),
                        pltpu.SemaphoreType.DMA(())],
        compiler_params=pltpu.CompilerParams(vmem_limit_bytes=vmem_limit),
    )(x_t, w1_b, b1_c, w2_b, b2_c, lap_t, scores_t, temp_t, sbias_f)

    # Back to the module's (N, nclass) layout; cheap one-off wrapper transpose.
    return out_t.T


def build_sym_laplacian(edge_index, num_nodes):
    """Dense L = I - D^-1/2 A D^-1/2 from edge_index (2, E). Plain-JAX glue.

    Matches PyG get_laplacian(..., normalization='sym') -- no self-loops added.
    """
    src, dst = edge_index[0], edge_index[1]
    A = jnp.zeros((num_nodes, num_nodes), jnp.float32).at[src, dst].add(1.0)
    deg = A.sum(axis=1)
    dinv = jnp.where(deg > 0, 1.0 / jnp.sqrt(deg), 0.0)
    A_norm = dinv[:, None] * A * dinv[None, :]
    return jnp.eye(num_nodes, dtype=jnp.float32) - A_norm


if __name__ == "__main__":
    # Small shapes consistent with the module.
    N, nfeat, nhid, nclass, K = 128, 32, 32, 8, 3

    key = jax.random.PRNGKey(0)
    k_x, k_w1, k_b1, k_w2, k_b2, k_s = jax.random.split(key, 6)

    # Node features.
    x = jax.random.normal(k_x, (N, nfeat), jnp.float32)

    # Undirected ring graph: edges (i, i+1) and (i+1, i).
    idx = jnp.arange(N)
    src = jnp.concatenate([idx, (idx + 1) % N])
    dst = jnp.concatenate([(idx + 1) % N, idx])
    edge_index = jnp.stack([src, dst])                       # (2, 2N)
    lap = build_sym_laplacian(edge_index, N)

    # Parameters in PyTorch Linear layout: weight (out, in), bias (out,).
    w1 = jax.random.normal(k_w1, (nhid, nfeat), jnp.float32) * (1.0 / jnp.sqrt(nfeat))
    b1 = (jax.random.uniform(k_b1, (nhid,), jnp.float32) - 0.5) * 0.1
    w2 = jax.random.normal(k_w2, (nclass, nhid), jnp.float32) * (1.0 / jnp.sqrt(nhid))
    b2 = (jax.random.uniform(k_b2, (nclass,), jnp.float32) - 0.5) * 0.1

    # Agcn_prop params: temp filled with 1, scores ~ U(-1, 1) (stdv = 1/sqrt(1)),
    # score biases = 0.  scores stacked row-wise as (K+1, nclass).
    temp = jnp.ones((K,), jnp.float32)
    scores = jax.random.uniform(k_s, (K + 1, nclass), jnp.float32,
                                minval=-1.0, maxval=1.0)
    sbias = jnp.zeros((K + 1,), jnp.float32)

    out = agcn_forward(x, w1, b1, w2, b2, lap, temp, scores, sbias, K=K)
    jax.block_until_ready(out)

    assert out.shape == (N, nclass)
    # log_softmax rows should sum to ~1 after exp.
    row_sums = jnp.exp(out).sum(axis=1)
    assert bool(jnp.all(jnp.abs(row_sums - 1.0) < 1e-3))
    print("KERNEL_OK")
</pallas_src>

<mosaic_0001>
module attributes {stable_mosaic.version = 11 : i64} {
  func.func @_agcn_kernel(%arg0: memref<32x128xbf16, #tpu.memory_space<vmem>>, %arg1: memref<32x32xbf16, #tpu.memory_space<vmem>>, %arg2: memref<32x1xf32, #tpu.memory_space<vmem>>, %arg3: memref<8x32xbf16, #tpu.memory_space<vmem>>, %arg4: memref<8x1xf32, #tpu.memory_space<vmem>>, %arg5: memref<128x128xbf16, #tpu.memory_space<any>>, %arg6: memref<8x4xf32, #tpu.memory_space<vmem>>, %arg7: memref<3xf32, #tpu.memory_space<smem>>, %arg8: memref<4xf32, #tpu.memory_space<smem>>, %arg9: memref<8x128xf32, #tpu.memory_space<vmem>>, %arg10: memref<128x128xbf16, #tpu.memory_space<vmem>>, %arg11: memref<!tpu.dma_semaphore, #tpu.memory_space<semaphore_mem>>) attributes {dimension_semantics = [], scalar_prefetch = 0 : i64, scratch_operands = 2 : i64, tpu.core_type = #tpu.core_type<tc>} {
    tpu.enqueue_dma source(%arg5 : memref<128x128xbf16, #tpu.memory_space<any>>) target(%arg10 : memref<128x128xbf16, #tpu.memory_space<vmem>>) target_semaphore(%arg11 : memref<!tpu.dma_semaphore, #tpu.memory_space<semaphore_mem>>)
    %c0 = arith.constant 0 : index
    %c0_0 = arith.constant 0 : index
    %0 = vector.load %arg1[%c0, %c0_0] : memref<32x32xbf16, #tpu.memory_space<vmem>>, vector<32x32xbf16>
    %c0_1 = arith.constant 0 : index
    %c0_2 = arith.constant 0 : index
    %1 = vector.load %arg0[%c0_1, %c0_2] : memref<32x128xbf16, #tpu.memory_space<vmem>>, vector<32x128xbf16>
    %cst = arith.constant dense<0.000000e+00> : vector<32x128xf32>
    %2 = tpu.matmul %0, %1, %cst {dimension_numbers = #tpu.dot_dimension_numbers<[1], [0], [0], [1], [0, 0, 1, 1], [], []>} : vector<32x32xbf16>, vector<32x128xbf16>, vector<32x128xf32> -> vector<32x128xf32>
    %c0_3 = arith.constant 0 : index
    %c0_4 = arith.constant 0 : index
    %3 = vector.load %arg2[%c0_3, %c0_4] : memref<32x1xf32, #tpu.memory_space<vmem>>, vector<32x1xf32>
    %4 = vector.broadcast %3 : vector<32x1xf32> to vector<32x128xf32>
    %5 = arith.addf %2, %4 : vector<32x128xf32>
    %cst_5 = arith.constant 0.000000e+00 : f32
    %6 = vector.broadcast %cst_5 : f32 to vector<32x128xf32>
    %7 = arith.maximumf %5, %6 : vector<32x128xf32>
    %c0_6 = arith.constant 0 : index
    %c0_7 = arith.constant 0 : index
    %8 = vector.load %arg3[%c0_6, %c0_7] : memref<8x32xbf16, #tpu.memory_space<vmem>>, vector<8x32xbf16>
    %9 = arith.truncf %7 : vector<32x128xf32> to vector<32x128xbf16>
    %cst_8 = arith.constant dense<0.000000e+00> : vector<8x128xf32>
    %10 = tpu.matmul %8, %9, %cst_8 {dimension_numbers = #tpu.dot_dimension_numbers<[1], [0], [0], [1], [0, 0, 1, 1], [], []>} : vector<8x32xbf16>, vector<32x128xbf16>, vector<8x128xf32> -> vector<8x128xf32>
    %c0_9 = arith.constant 0 : index
    %c0_10 = arith.constant 0 : index
    %11 = vector.load %arg4[%c0_9, %c0_10] : memref<8x1xf32, #tpu.memory_space<vmem>>, vector<8x1xf32>
    %12 = vector.broadcast %11 : vector<8x1xf32> to vector<8x128xf32>
    %13 = arith.addf %10, %12 : vector<8x128xf32>
    %c0_11 = arith.constant 0 : index
    %c0_12 = arith.constant 0 : index
    %14 = vector.load %arg6[%c0_11, %c0_12] : memref<8x4xf32, #tpu.memory_space<vmem>>, vector<8x1xf32>
    %15 = vector.broadcast %14 : vector<8x1xf32> to vector<8x128xf32>
    %16 = arith.mulf %13, %15 : vector<8x128xf32>
    %cst_13 = arith.constant dense<0.000000e+00> : vector<128xf32>
    %17 = vector.multi_reduction <add>, %16, %cst_13 [0] : vector<8x128xf32> to vector<128xf32>
    %18 = vector.shape_cast %17 : vector<128xf32> to vector<1x128xf32>
    %c0_14 = arith.constant 0 : index
    %19 = memref.load %arg8[%c0_14] : memref<4xf32, #tpu.memory_space<smem>>
    %20 = vector.broadcast %19 : f32 to vector<1x128xf32>
    %21 = arith.addf %18, %20 : vector<1x128xf32>
    %22 = arith.negf %21 : vector<1x128xf32>
    %23 = math.exp %22 : vector<1x128xf32>
    %cst_15 = arith.constant 1.000000e+00 : f32
    %24 = vector.broadcast %cst_15 : f32 to vector<1x128xf32>
    %25 = arith.addf %24, %23 : vector<1x128xf32>
    %26 = arith.divf %24, %25 : vector<1x128xf32>
    %27 = vector.broadcast %26 : vector<1x128xf32> to vector<8x128xf32>
    %28 = arith.mulf %27, %13 : vector<8x128xf32>
    tpu.wait_dma2 semaphore(%arg11 : memref<!tpu.dma_semaphore, #tpu.memory_space<semaphore_mem>>) src(%arg5 : memref<128x128xbf16, #tpu.memory_space<any>>) dst(%arg10 : memref<128x128xbf16, #tpu.memory_space<vmem>>)
    %c0_16 = arith.constant 0 : index
    %c0_17 = arith.constant 0 : index
    %29 = vector.load %arg10[%c0_16, %c0_17] : memref<128x128xbf16, #tpu.memory_space<vmem>>, vector<128x128xbf16>
    %30 = arith.truncf %13 : vector<8x128xf32> to vector<8x128xbf16>
    %cst_18 = arith.constant dense<0.000000e+00> : vector<8x128xf32>
    %31 = tpu.matmul %30, %29, %cst_18 {dimension_numbers = #tpu.dot_dimension_numbers<[1], [0], [0], [1], [0, 0, 1, 1], [], []>} : vector<8x128xbf16>, vector<128x128xbf16>, vector<8x128xf32> -> vector<8x128xf32>
    %c0_19 = arith.constant 0 : index
    %32 = memref.load %arg7[%c0_19] : memref<3xf32, #tpu.memory_space<smem>>
    %33 = vector.broadcast %32 : f32 to vector<8x128xf32>
    %34 = arith.mulf %33, %31 : vector<8x128xf32>
    %35 = arith.subf %13, %34 : vector<8x128xf32>
    %c0_20 = arith.constant 0 : index
    %c1 = arith.constant 1 : index
    %36 = vector.load %arg6[%c0_20, %c1] : memref<8x4xf32, #tpu.memory_space<vmem>>, vector<8x1xf32>
    %37 = vector.broadcast %36 : vector<8x1xf32> to vector<8x128xf32>
    %38 = arith.mulf %35, %37 : vector<8x128xf32>
    %cst_21 = arith.constant dense<0.000000e+00> : vector<128xf32>
    %39 = vector.multi_reduction <add>, %38, %cst_21 [0] : vector<8x128xf32> to vector<128xf32>
    %40 = vector.shape_cast %39 : vector<128xf32> to vector<1x128xf32>
    %c1_22 = arith.constant 1 : index
    %41 = memref.load %arg8[%c1_22] : memref<4xf32, #tpu.memory_space<smem>>
    %42 = vector.broadcast %41 : f32 to vector<1x128xf32>
    %43 = arith.addf %40, %42 : vector<1x128xf32>
    %44 = arith.negf %43 : vector<1x128xf32>
    %45 = math.exp %44 : vector<1x128xf32>
    %cst_23 = arith.constant 1.000000e+00 : f32
    %46 = vector.broadcast %cst_23 : f32 to vector<1x128xf32>
    %47 = arith.addf %46, %45 : vector<1x128xf32>
    %48 = arith.divf %46, %47 : vector<1x128xf32>
    %49 = vector.broadcast %48 : vector<1x128xf32> to vector<8x128xf32>
    %50 = arith.mulf %49, %35 : vector<8x128xf32>
    %51 = arith.addf %28, %50 : vector<8x128xf32>
    %52 = arith.truncf %35 : vector<8x128xf32> to vector<8x128xbf16>
    %cst_24 = arith.constant dense<0.000000e+00> : vector<8x128xf32>
    %53 = tpu.matmul %52, %29, %cst_24 {dimension_numbers = #tpu.dot_dimension_numbers<[1], [0], [0], [1], [0, 0, 1, 1], [], []>} : vector<8x128xbf16>, vector<128x128xbf16>, vector<8x128xf32> -> vector<8x128xf32>
    %c1_25 = arith.constant 1 : index
    %54 = memref.load %arg7[%c1_25] : memref<3xf32, #tpu.memory_space<smem>>
    %55 = vector.broadcast %54 : f32 to vector<8x128xf32>
    %56 = arith.mulf %55, %53 : vector<8x128xf32>
    %57 = arith.subf %35, %56 : vector<8x128xf32>
    %c0_26 = arith.constant 0 : index
    %c2 = arith.constant 2 : index
    %58 = vector.load %arg6[%c0_26, %c2] : memref<8x4xf32, #tpu.memory_space<vmem>>, vector<8x1xf32>
    %59 = vector.broadcast %58 : vector<8x1xf32> to vector<8x128xf32>
    %60 = arith.mulf %57, %59 : vector<8x128xf32>
    %cst_27 = arith.constant dense<0.000000e+00> : vector<128xf32>
    %61 = vector.multi_reduction <add>, %60, %cst_27 [0] : vector<8x128xf32> to vector<128xf32>
    %62 = vector.shape_cast %61 : vector<128xf32> to vector<1x128xf32>
    %c2_28 = arith.constant 2 : index
    %63 = memref.load %arg8[%c2_28] : memref<4xf32, #tpu.memory_space<smem>>
    %64 = vector.broadcast %63 : f32 to vector<1x128xf32>
    %65 = arith.addf %62, %64 : vector<1x128xf32>
    %66 = arith.negf %65 : vector<1x128xf32>
    %67 = math.exp %66 : vector<1x128xf32>
    %cst_29 = arith.constant 1.000000e+00 : f32
    %68 = vector.broadcast %cst_29 : f32 to vector<1x128xf32>
    %69 = arith.addf %68, %67 : vector<1x128xf32>
    %70 = arith.divf %68, %69 : vector<1x128xf32>
    %71 = vector.broadcast %70 : vector<1x128xf32> to vector<8x128xf32>
    %72 = arith.mulf %71, %57 : vector<8x128xf32>
    %73 = arith.addf %51, %72 : vector<8x128xf32>
    %74 = arith.truncf %57 : vector<8x128xf32> to vector<8x128xbf16>
    %cst_30 = arith.constant dense<0.000000e+00> : vector<8x128xf32>
    %75 = tpu.matmul %74, %29, %cst_30 {dimension_numbers = #tpu.dot_dimension_numbers<[1], [0], [0], [1], [0, 0, 1, 1], [], []>} : vector<8x128xbf16>, vector<128x128xbf16>, vector<8x128xf32> -> vector<8x128xf32>
    %c2_31 = arith.constant 2 : index
    %76 = memref.load %arg7[%c2_31] : memref<3xf32, #tpu.memory_space<smem>>
    %77 = vector.broadcast %76 : f32 to vector<8x128xf32>
    %78 = arith.mulf %77, %75 : vector<8x128xf32>
    %79 = arith.subf %57, %78 : vector<8x128xf32>
    %c0_32 = arith.constant 0 : index
    %c3 = arith.constant 3 : index
    %80 = vector.load %arg6[%c0_32, %c3] : memref<8x4xf32, #tpu.memory_space<vmem>>, vector<8x1xf32>
    %81 = vector.broadcast %80 : vector<8x1xf32> to vector<8x128xf32>
    %82 = arith.mulf %79, %81 : vector<8x128xf32>
    %cst_33 = arith.constant dense<0.000000e+00> : vector<128xf32>
    %83 = vector.multi_reduction <add>, %82, %cst_33 [0] : vector<8x128xf32> to vector<128xf32>
    %84 = vector.shape_cast %83 : vector<128xf32> to vector<1x128xf32>
    %c3_34 = arith.constant 3 : index
    %85 = memref.load %arg8[%c3_34] : memref<4xf32, #tpu.memory_space<smem>>
    %86 = vector.broadcast %85 : f32 to vector<1x128xf32>
    %87 = arith.addf %84, %86 : vector<1x128xf32>
    %88 = arith.negf %87 : vector<1x128xf32>
    %89 = math.exp %88 : vector<1x128xf32>
    %cst_35 = arith.constant 1.000000e+00 : f32
    %90 = vector.broadcast %cst_35 : f32 to vector<1x128xf32>
    %91 = arith.addf %90, %89 : vector<1x128xf32>
    %92 = arith.divf %90, %91 : vector<1x128xf32>
    %93 = vector.broadcast %92 : vector<1x128xf32> to vector<8x128xf32>
    %94 = arith.mulf %93, %79 : vector<8x128xf32>
    %95 = arith.addf %73, %94 : vector<8x128xf32>
    %cst_36 = arith.constant dense<0xFF800000> : vector<128xf32>
    %96 = vector.multi_reduction <maximumf>, %95, %cst_36 [0] : vector<8x128xf32> to vector<128xf32>
    %97 = vector.shape_cast %96 : vector<128xf32> to vector<1x128xf32>
    %98 = vector.broadcast %97 : vector<1x128xf32> to vector<8x128xf32>
    %99 = arith.subf %95, %98 : vector<8x128xf32>
    %100 = math.exp %99 : vector<8x128xf32>
    %cst_37 = arith.constant dense<0.000000e+00> : vector<128xf32>
    %101 = vector.multi_reduction <add>, %100, %cst_37 [0] : vector<8x128xf32> to vector<128xf32>
    %102 = vector.shape_cast %101 : vector<128xf32> to vector<1x128xf32>
    %103 = math.log %102 : vector<1x128xf32>
    %104 = vector.broadcast %103 : vector<1x128xf32> to vector<8x128xf32>
    %105 = arith.subf %99, %104 : vector<8x128xf32>
    %c0_38 = arith.constant 0 : index
    %c0_39 = arith.constant 0 : index
    %106 = vector.load %arg9[%c0_38, %c0_39] : memref<8x128xf32, #tpu.memory_space<vmem>>, vector<8x128xf32>
    tpu.vector_store %arg9[%c0_38, %c0_39], %105 {strides = array<i32>} : memref<8x128xf32, #tpu.memory_space<vmem>>, vector<8x128xf32>,
    return
  }
}

</mosaic_0001>

<llo_original>
// kernel: tpu_custom_call.1
$region0: #{tpu_custom_call.1}
  #allocation0 [shape = 'u32[]', space=smem, size = 0x4, offset = 0x4, fixed_abs, tag = 'smem constant byte address 0x4 - core index']
  #allocation1 [shape = 'u32[144,128]{1,0:T(1,128)}', space=vmem, size = 0x12000, scoped, tag = 'internal scratch']
  #allocation2 [shape = 'bf16[128,128]{1,0:T(16,128)(2,1)}', space=vmem, size = 0x8000, scoped, tag = 'scratch operand']
  #allocation3 [shape = 's32[1]{0}', space=sflag, size = 0x4, scoped, tag = 'scratch operand']
  #allocation14 [shape = 's32[]', space=sflag, size = 0x4, offset = 0, fixed_abs, tag = 'sflag constant byte address 0x0 - dummy sync flag']
  %s0 = inlined_call_operand.hbm [shape: bf16[32,128], index: 0, kind: input, shape index: {}]
  %s1 = inlined_call_operand.hbm [shape: bf16[32,32], index: 1, kind: input, shape index: {}]
  %s2 = inlined_call_operand.vmem [shape: f32[32,1], index: 2, kind: input, shape index: {}]
  %s3 = inlined_call_operand.vmem [shape: bf16[8,32], index: 3, kind: input, shape index: {}]
  %s4 = inlined_call_operand.vmem [shape: f32[8,1], index: 4, kind: input, shape index: {}]
  %s5 = inlined_call_operand.vmem [shape: bf16[128,128], index: 5, kind: input, shape index: {}]
  %s6 = inlined_call_operand.vmem [shape: f32[8,4], index: 6, kind: input, shape index: {}]
  %s7 = inlined_call_operand.vmem [shape: f32[3], index: 7, kind: input, shape index: {}]
  %s8 = inlined_call_operand.vmem [shape: f32[4], index: 8, kind: input, shape index: {}]
  %s9 = inlined_call_operand.hbm [shape: f32[8,128], index: 9, kind: output, shape index: {}]
  %s10 = sld [smem:[#allocation0]]
  $region92: #{tpu_custom_call.1} parent=0
    _
  %s12 = ssub.s32 1, %s10
  %s13 = scalar_select 0, %s12, %s10
  $region1: #{tpu_custom_call.1} parent=0
    #allocation4 [shape = 'u8[8192]{0}', space=vmem, size = 0x2000, scoped, tag = 'input window, operand 0, single buffered']
    #allocation5 [shape = 's32[1]{0}', space=sflag, size = 0x4, scoped, tag = 'scoped memory for tpu_custom_call.1']
    #allocation6 [shape = 's32[1]{0}', space=sflag, size = 0x4, scoped, tag = 'scoped memory for tpu_custom_call.1']
    #allocation7 [shape = 's32[1]{0}', space=sflag, size = 0x4, scoped, tag = 'scoped memory for tpu_custom_call.1']
    #allocation8 [shape = 'u8[8192]{0}', space=vmem, size = 0x2000, scoped, tag = 'input window, operand 1, single buffered']
    #allocation9 [shape = 's32[1]{0}', space=sflag, size = 0x4, scoped, tag = 'scoped memory for tpu_custom_call.1']
    #allocation10 [shape = 'u8[512]{0}', space=smem, size = 0x200, scoped, tag = 'input window, operand 7, single buffered']
    #allocation11 [shape = 'u8[512]{0}', space=smem, size = 0x200, scoped, tag = 'input window, operand 8, single buffered']
    #allocation12 [shape = 's32[1]{0}', space=sflag, size = 0x4, scoped, tag = 'scoped memory for tpu_custom_call.1']
    #allocation13 [shape = 'u8[4096]{0}', space=vmem, size = 0x1000, scoped, tag = 'output window, operand 0, single buffered']
    %14 = vsyncpa [#allocation5], 0
    %15 = vsyncpa [#allocation9], 0
    %16 = vsyncpa [#allocation7], 0
    %17 = vsyncpa [#allocation12], 0
    %18 = vsyncpa [#allocation6], 0
    // Predicated region
    $region2: #{tpu_custom_call.1} parent=1 // pred_check
      _
    $region3: #{tpu_custom_call.1} parent=1 // pred_check_branch
      %20 = sbr.rel (0) target = $region5
    $region4: #{tpu_custom_call.1} parent=1 // pred_region
      %s22 = ssub.s32 256, 256
      %23 = vsyncadd [#allocation5], %s22
      %s24 = sshll.u32 [#allocation4], 4
      %s25 = int_to_ptr.vmem [resolvable:$true] %s24
      %30 = dma.hbm_to_vmem [thread:$0]  %s0, 256, %s25, [#allocation5], 64, 64, 4
    $region5: #{tpu_custom_call.1} parent=1 // pred_fallthru
      _
    // Predicated region
    $region6: #{tpu_custom_call.1} parent=1 // pred_check
      _
    $region7: #{tpu_custom_call.1} parent=1 // pred_check_branch
      %32 = sbr.rel (0) target = $region9
    $region8: #{tpu_custom_call.1} parent=1 // pred_region
      %s34 = ssub.s32 256, 256
      %35 = vsyncadd [#allocation9], %s34
      %s36 = sshll.u32 [#allocation8], 4
      %s37 = int_to_ptr.vmem [resolvable:$true] %s36
      %42 = dma.hbm_to_vmem [thread:$0]  %s1, 256, %s37, [#allocation9], 64, 64, 4
    $region9: #{tpu_custom_call.1} parent=1 // pred_fallthru
      _
    // Predicated region
    $region10: #{tpu_custom_call.1} parent=1 // pred_check
      _
    $region11: #{tpu_custom_call.1} parent=1 // pred_check_branch
      %44 = sbr.rel (0) target = $region13
    $region12: #{tpu_custom_call.1} parent=1 // pred_region
      _
    $region13: #{tpu_custom_call.1} parent=1 // pred_fallthru
      _
    // Predicated region
    $region14: #{tpu_custom_call.1} parent=1 // pred_check
      _
    $region15: #{tpu_custom_call.1} parent=1 // pred_check_branch
      %46 = sbr.rel (0) target = $region17
    $region16: #{tpu_custom_call.1} parent=1 // pred_region
      _
    $region17: #{tpu_custom_call.1} parent=1 // pred_fallthru
      _
    // Predicated region
    $region18: #{tpu_custom_call.1} parent=1 // pred_check
      _
    $region19: #{tpu_custom_call.1} parent=1 // pred_check_branch
      %48 = sbr.rel (0) target = $region21
    $region20: #{tpu_custom_call.1} parent=1 // pred_region
      _
    $region21: #{tpu_custom_call.1} parent=1 // pred_fallthru
      _
    // Predicated region
    $region22: #{tpu_custom_call.1} parent=1 // pred_check
      _
    $region23: #{tpu_custom_call.1} parent=1 // pred_check_branch
      %50 = sbr.rel (0) target = $region25
    $region24: #{tpu_custom_call.1} parent=1 // pred_region
      _
    $region25: #{tpu_custom_call.1} parent=1 // pred_fallthru
      _
    // Predicated region
    $region26: #{tpu_custom_call.1} parent=1 // pred_check
      _
    $region27: #{tpu_custom_call.1} parent=1 // pred_check_branch
      %52 = sbr.rel (0) target = $region29
    $region28: #{tpu_custom_call.1} parent=1 // pred_region
      %s54 = ssub.s32 16, 16
      %55 = vsyncadd [#allocation7], %s54
      %s57 = sshll.u32 %s7, 4
      %s58 = int_to_ptr.vmem [resolvable:$true] %s57
      %60 = dma.vmem_to_smem %s58, 16, [#allocation10], [#allocation7]
    $region29: #{tpu_custom_call.1} parent=1 // pred_fallthru
      _
    // Predicated region
    $region30: #{tpu_custom_call.1} parent=1 // pred_check
      _
    $region31: #{tpu_custom_call.1} parent=1 // pred_check_branch
      %62 = sbr.rel (0) target = $region33
    $region32: #{tpu_custom_call.1} parent=1 // pred_region
      %s64 = ssub.s32 16, 16
      %65 = vsyncadd [#allocation12], %s64
      %s67 = sshll.u32 %s8, 4
      %s68 = int_to_ptr.vmem [resolvable:$true] %s67
      %70 = dma.vmem_to_smem %s68, 16, [#allocation11], [#allocation12]
    $region33: #{tpu_custom_call.1} parent=1 // pred_fallthru
      _
    // Predicated region
    $region34: #{tpu_custom_call.1} parent=1 // pred_check
      _
    $region35: #{tpu_custom_call.1} parent=1 // pred_check_branch
      %72 = sbr.rel (0) target = $region37
    $region36: #{tpu_custom_call.1} parent=1 // pred_region
      %73 = dma.done [#allocation5], 256
    $region37: #{tpu_custom_call.1} parent=1 // pred_fallthru
      _
    // Predicated region
    $region38: #{tpu_custom_call.1} parent=1 // pred_check
      _
    $region39: #{tpu_custom_call.1} parent=1 // pred_check_branch
      %75 = sbr.rel (0) target = $region41
    $region40: #{tpu_custom_call.1} parent=1 // pred_region
      %76 = dma.done [#allocation9], 256
    $region41: #{tpu_custom_call.1} parent=1 // pred_fallthru
      _
    // Predicated region
    $region42: #{tpu_custom_call.1} parent=1 // pred_check
      _
    $region43: #{tpu_custom_call.1} parent=1 // pred_check_branch
      %78 = sbr.rel (0) target = $region45
    $region44: #{tpu_custom_call.1} parent=1 // pred_region
      %79 = dma.done [#allocation7], 16
    $region45: #{tpu_custom_call.1} parent=1 // pred_fallthru
      _
    // Predicated region
    $region46: #{tpu_custom_call.1} parent=1 // pred_check
      _
    $region47: #{tpu_custom_call.1} parent=1 // pred_check_branch
      %81 = sbr.rel (0) target = $region49
    $region48: #{tpu_custom_call.1} parent=1 // pred_region
      %82 = dma.done [#allocation12], 16
    $region49: #{tpu_custom_call.1} parent=1 // pred_fallthru
      _
    %83 = sfence
    %p86 = scmp.lt.u32.totalorder 64, 8
    %p87 = pneg %p86
    // Predicated region
    $region50: #{tpu_custom_call.1} parent=1 // pred_check
      _
    $region51: #{tpu_custom_call.1} parent=1 // pred_check_branch
      %89 = sbr.rel (%p86) target = $region53
    $region52: #{tpu_custom_call.1} parent=1 // pred_region
      %s104 = sand.u32 64, 7
      %p105 = scmp.eq.s32.totalorder %s104, 0
      // Predicated region
      $region65: #{tpu_custom_call.1} parent=52 // pred_check
        %p106 = pneg %p105
      $region66: #{tpu_custom_call.1} parent=52 // pred_check_branch
        %108 = sbr.rel (%p106) target = $region68
      $region67: #{tpu_custom_call.1} parent=52 // pred_region
        loop: start=0, step=1, limit=1
        $region69: #{tpu_custom_call.1} parent=67 // loop_pre_header
          _
        $region70: #{tpu_custom_call.1} parent=67 // loop_header
          %s110 = sphi 0, %s114
          %p111 = scmp.ge.s32.totalorder %s110, 1
          %s115 = sphi %s5, %s5
          %s116 = sphi [#allocation2], [#allocation2]
        $region71: #{tpu_custom_call.1} parent=67 // loop_header_branch
          %113 = sbr.rel (%p111) target = $region75
        $region72: #{tpu_custom_call.1} parent=67 // loop_body
          %v117 = vld [vmem:[%s115] sm:$0xff]
          %118 = vst [vmem:[%s116] sm:$0xff] %v117
          %v119 = vld [vmem:[%s115 + $0x8] sm:$0xff]
          %120 = vst [vmem:[%s116 + $0x8] sm:$0xff] %v119
          %v121 = vld [vmem:[%s115 + $0x10] sm:$0xff]
          %122 = vst [vmem:[%s116 + $0x10] sm:$0xff] %v121
          %v123 = vld [vmem:[%s115 + $0x18] sm:$0xff]
          %124 = vst [vmem:[%s116 + $0x18] sm:$0xff] %v123
          %v125 = vld [vmem:[%s115 + $0x20] sm:$0xff]
          %126 = vst [vmem:[%s116 + $0x20] sm:$0xff] %v125
          %v127 = vld [vmem:[%s115 + $0x28] sm:$0xff]
          %128 = vst [vmem:[%s116 + $0x28] sm:$0xff] %v127
          %v129 = vld [vmem:[%s115 + $0x30] sm:$0xff]
          %130 = vst [vmem:[%s116 + $0x30] sm:$0xff] %v129
          %v131 = vld [vmem:[%s115 + $0x38] sm:$0xff]
          %132 = vst [vmem:[%s116 + $0x38] sm:$0xff] %v131
        $region73: #{tpu_custom_call.1} parent=67 // loop_footer
          %s114 = sadd.s32 1, %s110
        $region74: #{tpu_custom_call.1} parent=67 // loop_footer_branch
          %109 = sbr.rel target = $region70
        $region75: #{tpu_custom_call.1} parent=67 // loop_exit
          _
      $region68: #{tpu_custom_call.1} parent=52 // pred_fallthru
        _
      %p133 = pneg %p105
      // Predicated region
      $region76: #{tpu_custom_call.1} parent=52 // pred_check
        _
      $region77: #{tpu_custom_call.1} parent=52 // pred_check_branch
        %135 = sbr.rel (%p105) target = $region79
      $region78: #{tpu_custom_call.1} parent=52 // pred_region
        %s136 = sand.u32 64, 7
      $region79: #{tpu_custom_call.1} parent=52 // pred_fallthru
        _
    $region53: #{tpu_custom_call.1} parent=1 // pred_fallthru
      _
    // Predicated region
    $region54: #{tpu_custom_call.1} parent=1 // pred_check
      %p90 = pneg %p86
    $region55: #{tpu_custom_call.1} parent=1 // pred_check_branch
      %92 = sbr.rel (%p90) target = $region57
    $region56: #{tpu_custom_call.1} parent=1 // pred_region
      %s93 = sshllo.u32 0, 64
      loop: start=0, step=1, limit=1
      $region58: #{tpu_custom_call.1} parent=56 // loop_pre_header
        _
      $region59: #{tpu_custom_call.1} parent=56 // loop_header
        %s95 = sphi 0, %s99
        %p96 = scmp.ge.s32.totalorder %s95, 1
        %s100 = sphi %s5, %s5
        %s101 = sphi [#allocation2], [#allocation2]
      $region60: #{tpu_custom_call.1} parent=56 // loop_header_branch
        %98 = sbr.rel (%p96) target = $region64
      $region61: #{tpu_custom_call.1} parent=56 // loop_body
        %v102 = vld [vmem:[%s100] sm:%s93]
        %103 = vst [vmem:[%s101] sm:%s93] %v102
      $region62: #{tpu_custom_call.1} parent=56 // loop_footer
        %s99 = sadd.s32 1, %s95
      $region63: #{tpu_custom_call.1} parent=56 // loop_footer_branch
        %94 = sbr.rel target = $region59
      $region64: #{tpu_custom_call.1} parent=56 // loop_exit
        _
    $region57: #{tpu_custom_call.1} parent=1 // pred_fallthru
      _
    // Predicated region
    $region80: #{tpu_custom_call.1} parent=1 // pred_check
      _
    $region81: #{tpu_custom_call.1} parent=1 // pred_check_branch
      %139 = sbr.rel (0) target = $region83
    $region82: #{tpu_custom_call.1} parent=1 // pred_region
      %140 = vsyncadd [#allocation3], 1024
    $region83: #{tpu_custom_call.1} parent=1 // pred_fallthru
      _
    %v141 = vld [vmem:[#allocation8] sm:$0xf]
    %v142 = vld [vmem:[#allocation8 + $0x4] sm:$0xf]
    %v143 = vld [vmem:[#allocation8 + $0x8] sm:$0xf]
    %v144 = vld [vmem:[#allocation8 + $0xc] sm:$0xf]
    %v145 = vld [vmem:[#allocation4] sm:$0xf]
    %v146 = vld [vmem:[#allocation4 + $0x4] sm:$0xf]
    %v147 = vld [vmem:[#allocation4 + $0x8] sm:$0xf]
    %v148 = vld [vmem:[#allocation4 + $0xc] sm:$0xf]
    %v149 = vld [vmem:[%s2] sm:$0xff]
    %v150 = vld [vmem:[%s2 + $0x8] sm:$0xff]
    %v151 = vld [vmem:[%s2 + $0x10] sm:$0xff]
    %v152 = vld [vmem:[%s2 + $0x18] sm:$0xff]
    %154 = vset.pattern.permute.xlu0 0
    %155 = vperm.xlu0 %154, %v149
    %v156 = vpop.permute.xlu0 %155
    %159 = vset.pattern.permute.xlu0 0
    %160 = vperm.xlu0 %159, %v150
    %v161 = vpop.permute.xlu0 %160
    %164 = vset.pattern.permute.xlu0 0
    %165 = vperm.xlu0 %164, %v151
    %v166 = vpop.permute.xlu0 %165
    %169 = vset.pattern.permute.xlu0 0
    %170 = vperm.xlu0 %169, %v152
    %v171 = vpop.permute.xlu0 %170
    %v177 = vunpack.c.l.b16 %v141
    %v178 = vunpack.c.l.b16 %v142
    %v179 = vunpack.c.l.b16 %v143
    %v180 = vunpack.c.l.b16 %v144
    %v181 = vpack.c.b16 %v178, %v177
    %v182 = vpack.c.b16 %v180, %v179
    %v187 = vunpack.c.l.b16 %v145
    %v188 = vunpack.c.l.b16 %v146
    %v189 = vunpack.c.l.b16 %v147
    %v190 = vunpack.c.l.b16 %v148
    %v191 = vpack.c.b16 %v188, %v187
    %v192 = vpack.c.b16 %v190, %v189
    %vm195 = vcmask 261120
    %v197 = vsel %vm195, %v181, 0
    %v200 = vsel %vm195, %v182, 0
    %202 = vmatprep.subr.bf16.mxu0 0
    %203 = vmatpush1.bf16.msra.mxu0 %v191
    %204 = vmatprep.subr.bf16.mxu0 0
    %205 = vmatpush1.bf16.msra.mxu0 %v192
    %206 = vmatprep.subr.bf16.mxu0 0
    %207 = vmatpush1.bf16.msra.mxu0 0
    %208 = vmatprep.subr.bf16.mxu0 0
    %209 = vmatpush1.bf16.msra.mxu0 0
    %210 = vmatprep.subr.bf16.mxu0 0
    %211 = vmatpush1.bf16.msra.mxu0 0
    %212 = vmatprep.subr.bf16.mxu0 0
    %213 = vmatpush1.bf16.msra.mxu0 0
    %214 = vmatprep.subr.bf16.mxu0 0
    %215 = vmatpush1.bf16.msra.mxu0 0
    %216 = vmatprep.subr.bf16.mxu0 0
    %217 = vmatpush1.bf16.msra.mxu0 0
    %218 = vmatprep.subr.bf16.mxu0 0
    %219 = vmatpush1.bf16.msra.mxu0 0
    %220 = vmatprep.subr.bf16.mxu0 0
    %221 = vmatpush1.bf16.msra.mxu0 0
    %222 = vmatprep.subr.bf16.mxu0 0
    %223 = vmatpush1.bf16.msra.mxu0 0
    %224 = vmatprep.subr.bf16.mxu0 0
    %225 = vmatpush1.bf16.msra.mxu0 0
    %226 = vmatprep.subr.bf16.mxu0 0
    %227 = vmatpush1.bf16.msra.mxu0 0
    %228 = vmatprep.subr.bf16.mxu0 0
    %229 = vmatpush1.bf16.msra.mxu0 0
    %230 = vmatprep.subr.bf16.mxu0 0
    %231 = vmatpush1.bf16.msra.mxu0 0
    %232 = vmatprep.subr.bf16.mxu0 0
    %233 = vmatpush1.bf16.msra.mxu0 0
    %234 = vmatprep.mubr.bf16.mxu0 0
    %235 = vmatmul.mubr.bf16.gmra.mrb[0].mxu0 %v197
    %v236 = vpop.f32.mrb[0].mxu0
    %v237 = vadd.f32 %v156, %v236
    %v238 = vpop.f32.mrb[0].mxu0
    %v239 = vpop.f32.mrb[0].mxu0
    %v240 = vadd.f32 %v161, %v239
    %v241 = vpop.f32.mrb[0].mxu0
    %242 = vmatprep.mubr.bf16.mxu0 0
    %243 = vmatmul.mubr.bf16.gmra.mrb[0].mxu0 %v200
    %v244 = vpop.f32.mrb[0].mxu0
    %v245 = vadd.f32 %v166, %v244
    %v246 = vpop.f32.mrb[0].mxu0
    %v247 = vpop.f32.mrb[0].mxu0
    %v248 = vadd.f32 %v171, %v247
    %v249 = vpop.f32.mrb[0].mxu0
    %250 = vdwg.mxu0
    %v251 = vmax.f32 %v237, 0.0
    %v252 = vmax.f32 %v240, 0.0
    %v253 = vmax.f32 %v245, 0.0
    %v254 = vmax.f32 %v248, 0.0
    %v255 = vld [vmem:[%s3] sm:$0xf]
    %v256 = vpack.c.bf16 %v252, %v251
    %v257 = vpack.c.bf16 %v254, %v253
    %v258 = vld [vmem:[%s4] sm:$0xff]
    %260 = vset.pattern.permute.xlu0 0
    %261 = vperm.xlu0 %260, %v258
    %v262 = vpop.permute.xlu0 %261
    %v265 = vsel %vm195, %v255, 0
    %267 = vmatprep.subr.bf16.mxu0 0
    %268 = vmatpush1.bf16.msra.mxu0 %v256
    %269 = vmatprep.subr.bf16.mxu0 0
    %270 = vmatpush1.bf16.msra.mxu0 %v257
    %271 = vmatprep.subr.bf16.mxu0 0
    %272 = vmatpush1.bf16.msra.mxu0 0
    %273 = vmatprep.subr.bf16.mxu0 0
    %274 = vmatpush1.bf16.msra.mxu0 0
    %275 = vmatprep.subr.bf16.mxu0 0
    %276 = vmatpush1.bf16.msra.mxu0 0
    %277 = vmatprep.subr.bf16.mxu0 0
    %278 = vmatpush1.bf16.msra.mxu0 0
    %279 = vmatprep.subr.bf16.mxu0 0
    %280 = vmatpush1.bf16.msra.mxu0 0
    %281 = vmatprep.subr.bf16.mxu0 0
    %282 = vmatpush1.bf16.msra.mxu0 0
    %283 = vmatprep.subr.bf16.mxu0 0
    %284 = vmatpush1.bf16.msra.mxu0 0
    %285 = vmatprep.subr.bf16.mxu0 0
    %286 = vmatpush1.bf16.msra.mxu0 0
    %287 = vmatprep.subr.bf16.mxu0 0
    %288 = vmatpush1.bf16.msra.mxu0 0
    %289 = vmatprep.subr.bf16.mxu0 0
    %290 = vmatpush1.bf16.msra.mxu0 0
    %291 = vmatprep.subr.bf16.mxu0 0
    %292 = vmatpush1.bf16.msra.mxu0 0
    %293 = vmatprep.subr.bf16.mxu0 0
    %294 = vmatpush1.bf16.msra.mxu0 0
    %295 = vmatprep.subr.bf16.mxu0 0
    %296 = vmatpush1.bf16.msra.mxu0 0
    %297 = vmatprep.subr.bf16.mxu0 0
    %298 = vmatpush1.bf16.msra.mxu0 0
    %299 = vmatprep.mubr.bf16.mxu0 0
    %300 = vmatmul.mubr.bf16.gmra.mrb[0].mxu0 %v265
    %v301 = vpop.f32.mrb[0].mxu0
    %v302 = vadd.f32 %v262, %v301
    %v303 = vpop.f32.mrb[0].mxu0
    %v304 = vpop.f32.mrb[0].mxu0
    %v305 = vpop.f32.mrb[0].mxu0
    %306 = vdwg.mxu0
    %v307 = vld [vmem:[%s6] sm:$0xff]
    %309 = vset.pattern.permute.xlu0 0
    %310 = vperm.xlu0 %309, %v307
    %v311 = vpop.permute.xlu0 %310
    %v313 = vmul.f32 %v302, %v311
    %v314 = vrot.slane %v313, 4
    %v315 = vadd.f32 %v313, %v314
    %v316 = vrot.slane %v315, 2
    %v317 = vadd.f32 %v315, %v316
    %v318 = vrot.slane %v317, 1
    %v319 = vadd.f32 %v317, %v318
    %s320 = sld [smem:[#allocation11]]
    %v321 = vstv %s320
    %v322 = vadd.f32 %v319, %v321
    %v323 = vxor.u32 %v322, 2147483648
    %v324 = vmul.f32 %v323, 1.442695
    %v325 = vpow.pop %v324
    %v326 = vadd.f32 %v325, 1.0
    %v327 = vrcp.pop %v326
    %v328 = vmul.f32 1.0, %v327
    %v329 = vmul.f32 %v328, %v302
    %s330 = smul.u32 4, 16
    %s331 = smul.u32 %s330, 1
    %s332 = sshll.u32 %s331, 4
    %333 = dma.done [#allocation3], %s332
    %v334 = vld [vmem:[#allocation2] sm:$0xff]
    %v335 = vld [vmem:[#allocation2 + $0x8] sm:$0xff]
    %v336 = vld [vmem:[#allocation2 + $0x10] sm:$0xff]
    %v337 = vld [vmem:[#allocation2 + $0x18] sm:$0xff]
    %v338 = vld [vmem:[#allocation2 + $0x20] sm:$0xff]
    %v339 = vld [vmem:[#allocation2 + $0x28] sm:$0xff]
    %v340 = vld [vmem:[#allocation2 + $0x30] sm:$0xff]
    %v341 = vld [vmem:[#allocation2 + $0x38] sm:$0xff]
    %v342 = vpack.c.bf16 %v302, %v302
    %343 = vmatprep.subr.bf16.mxu0 0
    %344 = vmatpush1.bf16.msra.mxu0 %v334
    %345 = vmatprep.subr.bf16.mxu0 0
    %346 = vmatpush1.bf16.msra.mxu0 %v335
    %347 = vmatprep.subr.bf16.mxu0 0
    %348 = vmatpush1.bf16.msra.mxu0 %v336
    %349 = vmatprep.subr.bf16.mxu0 0
    %350 = vmatpush1.bf16.msra.mxu0 %v337
    %351 = vmatprep.subr.bf16.mxu0 0
    %352 = vmatpush1.bf16.msra.mxu0 %v338
    %353 = vmatprep.subr.bf16.mxu0 0
    %354 = vmatpush1.bf16.msra.mxu0 %v339
    %355 = vmatprep.subr.bf16.mxu0 0
    %356 = vmatpush1.bf16.msra.mxu0 %v340
    %357 = vmatprep.subr.bf16.mxu0 0
    %358 = vmatpush1.bf16.msra.mxu0 %v341
    %359 = vmatprep.subr.bf16.mxu0 0
    %360 = vmatpush1.bf16.msra.mxu0 0
    %361 = vmatprep.subr.bf16.mxu0 0
    %362 = vmatpush1.bf16.msra.mxu0 0
    %363 = vmatprep.subr.bf16.mxu0 0
    %364 = vmatpush1.bf16.msra.mxu0 0
    %365 = vmatprep.subr.bf16.mxu0 0
    %366 = vmatpush1.bf16.msra.mxu0 0
    %367 = vmatprep.subr.bf16.mxu0 0
    %368 = vmatpush1.bf16.msra.mxu0 0
    %369 = vmatprep.subr.bf16.mxu0 0
    %370 = vmatpush1.bf16.msra.mxu0 0
    %371 = vmatprep.subr.bf16.mxu0 0
    %372 = vmatpush1.bf16.msra.mxu0 0
    %373 = vmatprep.subr.bf16.mxu0 0
    %374 = vmatpush1.bf16.msra.mxu0 0
    %375 = vmatprep.mubr.bf16.mxu0 0
    %376 = vmatmul.mubr.bf16.gmra.mrb[0].mxu0 %v342
    %v377 = vpop.f32.mrb[0].mxu0
    %v378 = vadd.f32 0.0, %v377
    %v379 = vpop.f32.mrb[0].mxu0
    %v380 = vpop.f32.mrb[0].mxu0
    %v381 = vpop.f32.mrb[0].mxu0
    %382 = vdwg.mxu0
    %s383 = sld [smem:[#allocation10]]
    %v384 = vstv %s383
    %v385 = vmul.f32 %v384, %v378
    %v386 = vsub.f32 %v302, %v385
    %v387 = vld [vmem:[%s6] sm:$0xff]
    %389 = vset.pattern.permute.xlu0 1
    %390 = vperm.xlu0 %389, %v387
    %v391 = vpop.permute.xlu0 %390
    %v393 = vmul.f32 %v386, %v391
    %v394 = vrot.slane %v393, 4
    %v395 = vadd.f32 %v393, %v394
    %v396 = vrot.slane %v395, 2
    %v397 = vadd.f32 %v395, %v396
    %v398 = vrot.slane %v397, 1
    %v399 = vadd.f32 %v397, %v398
    %s400 = sld [smem:[#allocation11 + $0x1]]
    %v401 = vstv %s400
    %v402 = vadd.f32 %v399, %v401
    %v403 = vxor.u32 %v402, 2147483648
    %v404 = vmul.f32 %v403, 1.442695
    %v405 = vpow.pop %v404
    %v406 = vadd.f32 %v405, 1.0
    %v407 = vrcp.pop %v406
    %v408 = vmul.f32 1.0, %v407
    %v409 = vmul.f32 %v408, %v386
    %v410 = vadd.f32 %v329, %v409
    %v411 = vpack.c.bf16 %v386, %v386
    %412 = vmatprep.subr.bf16.mxu0 0
    %413 = vmatpush1.bf16.msra.mxu0 %v334
    %414 = vmatprep.subr.bf16.mxu0 0
    %415 = vmatpush1.bf16.msra.mxu0 %v335
    %416 = vmatprep.subr.bf16.mxu0 0
    %417 = vmatpush1.bf16.msra.mxu0 %v336
    %418 = vmatprep.subr.bf16.mxu0 0
    %419 = vmatpush1.bf16.msra.mxu0 %v337
    %420 = vmatprep.subr.bf16.mxu0 0
    %421 = vmatpush1.bf16.msra.mxu0 %v338
    %422 = vmatprep.subr.bf16.mxu0 0
    %423 = vmatpush1.bf16.msra.mxu0 %v339
    %424 = vmatprep.subr.bf16.mxu0 0
    %425 = vmatpush1.bf16.msra.mxu0 %v340
    %426 = vmatprep.subr.bf16.mxu0 0
    %427 = vmatpush1.bf16.msra.mxu0 %v341
    %428 = vmatprep.subr.bf16.mxu0 0
    %429 = vmatpush1.bf16.msra.mxu0 0
    %430 = vmatprep.subr.bf16.mxu0 0
    %431 = vmatpush1.bf16.msra.mxu0 0
    %432 = vmatprep.subr.bf16.mxu0 0
    %433 = vmatpush1.bf16.msra.mxu0 0
    %434 = vmatprep.subr.bf16.mxu0 0
    %435 = vmatpush1.bf16.msra.mxu0 0
    %436 = vmatprep.subr.bf16.mxu0 0
    %437 = vmatpush1.bf16.msra.mxu0 0
    %438 = vmatprep.subr.bf16.mxu0 0
    %439 = vmatpush1.bf16.msra.mxu0 0
    %440 = vmatprep.subr.bf16.mxu0 0
    %441 = vmatpush1.bf16.msra.mxu0 0
    %442 = vmatprep.subr.bf16.mxu0 0
    %443 = vmatpush1.bf16.msra.mxu0 0
    %444 = vmatprep.mubr.bf16.mxu0 0
    %445 = vmatmul.mubr.bf16.gmra.mrb[0].mxu0 %v411
    %v446 = vpop.f32.mrb[0].mxu0
    %v447 = vadd.f32 0.0, %v446
    %v448 = vpop.f32.mrb[0].mxu0
    %v449 = vpop.f32.mrb[0].mxu0
    %v450 = vpop.f32.mrb[0].mxu0
    %451 = vdwg.mxu0
    %s452 = sld [smem:[#allocation10 + $0x1]]
    %v453 = vstv %s452
    %v454 = vmul.f32 %v453, %v447
    %v455 = vsub.f32 %v386, %v454
    %456 = vset.pattern.permute.xlu0 2
    %457 = vperm.xlu0 %456, %v387
    %v458 = vpop.permute.xlu0 %457
    %v460 = vmul.f32 %v455, %v458
    %v461 = vrot.slane %v460, 4
    %v462 = vadd.f32 %v460, %v461
    %v463 = vrot.slane %v462, 2
    %v464 = vadd.f32 %v462, %v463
    %v465 = vrot.slane %v464, 1
    %v466 = vadd.f32 %v464, %v465
    %s467 = sld [smem:[#allocation11 + $0x2]]
    %v468 = vstv %s467
    %v469 = vadd.f32 %v466, %v468
    %v470 = vxor.u32 %v469, 2147483648
    %v471 = vmul.f32 %v470, 1.442695
    %v472 = vpow.pop %v471
    %v473 = vadd.f32 %v472, 1.0
    %v474 = vrcp.pop %v473
    %v475 = vmul.f32 1.0, %v474
    %v476 = vmul.f32 %v475, %v455
    %v477 = vadd.f32 %v410, %v476
    %v478 = vpack.c.bf16 %v455, %v455
    %479 = vmatprep.subr.bf16.mxu0 0
    %480 = vmatpush1.bf16.msra.mxu0 %v334
    %481 = vmatprep.subr.bf16.mxu0 0
    %482 = vmatpush1.bf16.msra.mxu0 %v335
    %483 = vmatprep.subr.bf16.mxu0 0
    %484 = vmatpush1.bf16.msra.mxu0 %v336
    %485 = vmatprep.subr.bf16.mxu0 0
    %486 = vmatpush1.bf16.msra.mxu0 %v337
    %487 = vmatprep.subr.bf16.mxu0 0
    %488 = vmatpush1.bf16.msra.mxu0 %v338
    %489 = vmatprep.subr.bf16.mxu0 0
    %490 = vmatpush1.bf16.msra.mxu0 %v339
    %491 = vmatprep.subr.bf16.mxu0 0
    %492 = vmatpush1.bf16.msra.mxu0 %v340
    %493 = vmatprep.subr.bf16.mxu0 0
    %494 = vmatpush1.bf16.msra.mxu0 %v341
    %495 = vmatprep.subr.bf16.mxu0 0
    %496 = vmatpush1.bf16.msra.mxu0 0
    %497 = vmatprep.subr.bf16.mxu0 0
    %498 = vmatpush1.bf16.msra.mxu0 0
    %499 = vmatprep.subr.bf16.mxu0 0
    %500 = vmatpush1.bf16.msra.mxu0 0
    %501 = vmatprep.subr.bf16.mxu0 0
    %502 = vmatpush1.bf16.msra.mxu0 0
    %503 = vmatprep.subr.bf16.mxu0 0
    %504 = vmatpush1.bf16.msra.mxu0 0
    %505 = vmatprep.subr.bf16.mxu0 0
    %506 = vmatpush1.bf16.msra.mxu0 0
    %507 = vmatprep.subr.bf16.mxu0 0
    %508 = vmatpush1.bf16.msra.mxu0 0
    %509 = vmatprep.subr.bf16.mxu0 0
    %510 = vmatpush1.bf16.msra.mxu0 0
    %511 = vmatprep.mubr.bf16.mxu0 0
    %512 = vmatmul.mubr.bf16.gmra.mrb[0].mxu0 %v478
    %v513 = vpop.f32.mrb[0].mxu0
    %v514 = vadd.f32 0.0, %v513
    %v515 = vpop.f32.mrb[0].mxu0
    %v516 = vpop.f32.mrb[0].mxu0
    %v517 = vpop.f32.mrb[0].mxu0
    %518 = vdwg.mxu0
    %s519 = sld [smem:[#allocation10 + $0x2]]
    %v520 = vstv %s519
    %v521 = vmul.f32 %v520, %v514
    %v522 = vsub.f32 %v455, %v521
    %523 = vset.pattern.permute.xlu0 3
    %524 = vperm.xlu0 %523, %v387
    %v525 = vpop.permute.xlu0 %524
    %v527 = vmul.f32 %v522, %v525
    %v528 = vrot.slane %v527, 4
    %v529 = vadd.f32 %v527, %v528
    %v530 = vrot.slane %v529, 2
    %v531 = vadd.f32 %v529, %v530
    %v532 = vrot.slane %v531, 1
    %v533 = vadd.f32 %v531, %v532
    %s534 = sld [smem:[#allocation11 + $0x3]]
    %v535 = vstv %s534
    %v536 = vadd.f32 %v533, %v535
    %v537 = vxor.u32 %v536, 2147483648
    %v538 = vmul.f32 %v537, 1.442695
    %v539 = vpow.pop %v538
    %v540 = vadd.f32 %v539, 1.0
    %v541 = vrcp.pop %v540
    %v542 = vmul.f32 1.0, %v541
    %v543 = vmul.f32 %v542, %v522
    %v544 = vadd.f32 %v477, %v543
    %v545 = vrot.slane %v544, 4
    %v546 = vmax.f32 %v544, %v545
    %v547 = vrot.slane %v546, 2
    %v548 = vmax.f32 %v546, %v547
    %v549 = vrot.slane %v548, 1
    %v550 = vmax.f32 %v548, %v549
    %v551 = vsub.f32 %v544, %v550
    %v552 = vmul.f32 %v551, 1.442695
    %v553 = vpow.pop %v552
    %v554 = vrot.slane %v553, 4
    %v555 = vadd.f32 %v553, %v554
    %v556 = vrot.slane %v555, 2
    %v557 = vadd.f32 %v555, %v556
    %v558 = vrot.slane %v557, 1
    %v559 = vadd.f32 %v557, %v558
    %v560 = vlog2.pop %v559
    %v561 = vmul.f32 %v560, 0.6931472
    %v562 = vsub.f32 %v551, %v561
    %563 = vst [vmem:[#allocation13] sm:$0xff] %v562
    // Predicated region
    $region84: #{tpu_custom_call.1} parent=1 // pred_check
      _
    $region85: #{tpu_custom_call.1} parent=1 // pred_check_branch
      %565 = sbr.rel (0) target = $region87
    $region86: #{tpu_custom_call.1} parent=1 // pred_region
      %s567 = ssub.s32 128, 128
      %568 = vsyncadd [#allocation6], %s567
      %s570 = sshll.u32 [#allocation13], 4
      %s571 = int_to_ptr.vmem [resolvable:$true] %s570
      %573 = dma.vmem_to_hbm [thread:$0]  %s571, 128, %s9, [#allocation6]
    $region87: #{tpu_custom_call.1} parent=1 // pred_fallthru
      _
    // Predicated region
    $region88: #{tpu_custom_call.1} parent=1 // pred_check
      _
    $region89: #{tpu_custom_call.1} parent=1 // pred_check_branch
      %575 = sbr.rel (0) target = $region91
    $region90: #{tpu_custom_call.1} parent=1 // pred_region
      %576 = dma.done [#allocation6], 128
    $region91: #{tpu_custom_call.1} parent=1 // pred_fallthru
      _
    %577 = vsyncpa [#allocation5], 1
    %578 = vsyncpa [#allocation9], 1
    %579 = vsyncpa [#allocation6], 1
    %580 = vsyncpa [#allocation7], 1
    %581 = vsyncpa [#allocation12], 1
  %582 = vsyncmov [#allocation3]
  %s583 = vpop.sfrf %582
  %p584 = scmp.eq.s32.totalorder %s583, 0
  %p585 = pneg %p584
  %587 = shalt.err (%p585)

</llo_original>
